<compile_context>
chip_gen: v5e
topology: v5e:2x2
jax: 0.10.0
libtpu: 0.0.40
codegen_flags: <defaults>
</compile_context>

<pallas_src>
import jax
import jax.numpy as jnp
from jax import lax
from jax.experimental import pallas as pl
from jax.experimental.pallas import tpu as pltpu


def _round_up(x, m):
    return ((x + m - 1) // m) * m


# ----------------------------------------------------------------------------
# Kernel
# ----------------------------------------------------------------------------
def _make_kernel(num_hidden, compute_dtype):
    """Kernel over one batch tile: fused forest forward -> final output tile."""
    use_loop = num_hidden > 2   # deep MLP: visible loop, dynamic layer index

    def kernel(*refs):
        if num_hidden > 0:
            x_ref, w1_ref, b1_ref, wh_ref, bh_ref, wo_ref, bo_ref, out_ref = refs
        else:
            x_ref, w1_ref, b1_ref, wo_ref, bo_ref, out_ref = refs
            wh_ref = bh_ref = None

        # Layer 1: [TB, D_in] @ [D_in, HP] -> f32 acc, f32 bias-add + ReLU.
        h = jnp.dot(x_ref[...].astype(compute_dtype), w1_ref[...],
                    preferred_element_type=jnp.float32)
        h = jnp.maximum(h + b1_ref[...], 0.0)

        def layer(l, h):
            h = jnp.dot(h.astype(compute_dtype), wh_ref[l],
                        preferred_element_type=jnp.float32)
            return jnp.maximum(h + bh_ref[l], 0.0)

        if num_hidden > 0:
            if use_loop:
                h = lax.fori_loop(0, num_hidden, layer, h, unroll=True)
            else:
                for l in range(num_hidden):
                    h = layer(l, h)

        # Output layer (mean over trees folded into wo/bo): lane-dense store.
        y = jnp.dot(h.astype(compute_dtype), wo_ref[...],
                    preferred_element_type=jnp.float32) + bo_ref[...]
        out_ref[...] = y

    return kernel


# ----------------------------------------------------------------------------
# Weight packing (trace-time, plain JAX): per-tree -> fused block-diagonal.
# ----------------------------------------------------------------------------
def _pack_forest(params, compute_dtype):
    w1, b1, wh, bh, wo, bo = (params["w1"], params["b1"], params["wh"],
                              params["bh"], params["wo"], params["bo"])
    L = params["num_hidden"]
    T, d_in, H = w1.shape
    d_out = wo.shape[-1]

    TH = T * H
    HP = _round_up(TH, 128)          # lane-dense hidden width
    OP = _round_up(d_out, 128)       # lane-dense output width (mean folded in)

    # First layer: concatenate trees along the output (lane) axis.
    w1c = jnp.transpose(w1, (1, 0, 2)).reshape(d_in, TH)
    w1c = jnp.pad(w1c, ((0, 0), (0, HP - TH)))
    b1c = jnp.pad(b1.reshape(1, TH), ((0, 0), (0, HP - TH)))

    if L > 0:
        # Block-diagonal per-layer hidden weights: [L, TH, TH].
        eye_t = jnp.eye(T, dtype=jnp.float32)
        whl = jnp.einsum("tlij,ts->ltisj", wh, eye_t).reshape(L, TH, TH)
        whl = jnp.pad(whl, ((0, 0), (0, HP - TH), (0, HP - TH)))
        bhl = jnp.transpose(bh, (1, 2, 0, 3)).reshape(L, 1, TH)
        bhl = jnp.pad(bhl, ((0, 0), (0, 0), (0, HP - TH)))
    else:
        whl = bhl = None

    # Output layer with the 1/T tree-mean folded in: per-tree wo stacked along
    # the contraction axis (rows t*H:(t+1)*H belong to tree t), scaled by 1/T;
    # bias is the mean of the per-tree biases. Padded hidden lanes are exactly
    # zero through the ReLU chain, so zero-padding the extra rows is exact.
    wom = (wo.reshape(TH, d_out) / float(T))
    wom = jnp.pad(wom, ((0, HP - TH), (0, OP - d_out)))
    bom = jnp.pad(jnp.mean(bo, axis=0).reshape(1, d_out), ((0, 0), (0, OP - d_out)))

    return {
        "w1": w1c.astype(compute_dtype),
        "b1": b1c,                                    # biases stay f32
        "wh": None if whl is None else whl.astype(compute_dtype),
        "bh": bhl,
        "wo": wom.astype(compute_dtype),
        "bo": bom,
        "dims": (T, d_in, H, L, d_out, HP, OP),
    }


# ----------------------------------------------------------------------------
# Wrapper
# ----------------------------------------------------------------------------
def random_forest_mlp(x, params, *, compute_dtype=jnp.bfloat16, block_b=256):
    """Forward pass of RandomForestMLP.

    x: [B, input_dim] float32
    params: dict of stacked per-tree weights (see init_params).
    returns: [B, output_dim] float32 (mean over trees).
    """
    packed = _pack_forest(params, compute_dtype)
    T, d_in, H, L, d_out, HP, OP = packed["dims"]

    B = x.shape[0]
    TB = min(block_b, _round_up(B, 8))      # batch tile (sublane multiple)
    # v7x has 2 TensorCores: when the whole batch fits one tile, split it so
    # the "parallel" grid axis has >= 2 steps and both cores get work.
    if B > 8 and _round_up(B, TB) // TB < 2:
        TB = _round_up(-(-B // 2), 8)
    Bp = _round_up(B, TB)
    if Bp != B:
        x = jnp.pad(x, ((0, Bp - B), (0, 0)))
    nb = Bp // TB

    kernel = _make_kernel(L, compute_dtype)

    resident = dict(pipeline_mode=pl.Buffered(1))    # single-buffer weights
    in_specs = [
        pl.BlockSpec((TB, d_in), lambda b: (b, 0)),              # x: batch-tiled
        pl.BlockSpec((d_in, HP), lambda b: (0, 0), **resident),  # w1
        pl.BlockSpec((1, HP), lambda b: (0, 0), **resident),     # b1
    ]
    args = [x, packed["w1"], packed["b1"]]
    if L > 0:
        in_specs += [
            pl.BlockSpec((L, HP, HP), lambda b: (0, 0, 0), **resident),  # wh
            pl.BlockSpec((L, 1, HP), lambda b: (0, 0, 0), **resident),   # bh
        ]
        args += [packed["wh"], packed["bh"]]
    in_specs += [
        pl.BlockSpec((HP, OP), lambda b: (0, 0), **resident),    # wo (mean-folded)
        pl.BlockSpec((1, OP), lambda b: (0, 0), **resident),     # bo
    ]
    args += [packed["wo"], packed["bo"]]

    # Explicit VMEM budget: resident weights (single-buffered) + double-buffered
    # x/out tiles + live f32 intermediates, with 2x headroom; clamp to a range
    # that is safe on v5e/v6e (128 MiB) and v7x (64 MiB physical).
    wbytes = jnp.dtype(compute_dtype).itemsize
    w_total = (d_in * HP + HP * OP) * wbytes + (HP + OP) * 4
    if L > 0:
        w_total += L * HP * HP * wbytes + L * HP * 4
    io_total = 2 * TB * d_in * 4 + 2 * TB * OP * 4
    act_total = 2 * TB * HP * 4
    vmem_limit = int(min(max(2 * (w_total + io_total + act_total), 32 << 20),
                         64 << 20))

    out = pl.pallas_call(
        kernel,
        out_shape=jax.ShapeDtypeStruct((Bp, OP), jnp.float32),
        grid_spec=pltpu.PrefetchScalarGridSpec(
            num_scalar_prefetch=0,
            grid=(nb,),
            in_specs=in_specs,
            out_specs=pl.BlockSpec((TB, OP), lambda b: (b, 0)),
        ),
        compiler_params=pltpu.CompilerParams(
            dimension_semantics=("parallel",),   # batch axis -> 2 TCs on v7x
            vmem_limit_bytes=vmem_limit,
        ),
    )(*args)

    # Mean over trees is already folded into wo/bo; just un-pad.
    return out[:B, :d_out]


# ----------------------------------------------------------------------------
# Parameter init + pure-JAX reference
# ----------------------------------------------------------------------------
def init_params(key, num_trees, num_layers, input_dim, hidden_dim, output_dim):
    """Per-tree stacked parameters (f32), matching the PyTorch module layout."""
    assert num_layers >= 2, "need at least input and output linear layers"
    L_hid = num_layers - 2
    ks = jax.random.split(key, 6)
    scale = 0.1

    def rnd(k, shape):
        return scale * jax.random.normal(k, shape, jnp.float32)

    return {
        "w1": rnd(ks[0], (num_trees, input_dim, hidden_dim)),
        "b1": rnd(ks[1], (num_trees, 1, hidden_dim)),
        "wh": rnd(ks[2], (num_trees, L_hid, hidden_dim, hidden_dim)),
        "bh": rnd(ks[3], (num_trees, L_hid, 1, hidden_dim)),
        "wo": rnd(ks[4], (num_trees, hidden_dim, output_dim)),
        "bo": rnd(ks[5], (num_trees, 1, output_dim)),
        "num_hidden": L_hid,
    }


def reference_forward(x, params):
    """Pure-JAX (f32) reference matching the PyTorch semantics."""
    w1, b1, wh, bh, wo, bo = (params["w1"], params["b1"], params["wh"],
                              params["bh"], params["wo"], params["bo"])
    L = params["num_hidden"]
    outs = []
    for t in range(w1.shape[0]):
        h = jnp.maximum(x @ w1[t] + b1[t], 0.0)
        for l in range(L):
            h = jnp.maximum(h @ wh[t, l] + bh[t, l], 0.0)
        outs.append(h @ wo[t] + bo[t])
    return jnp.mean(jnp.stack(outs, axis=0), axis=0)


# ----------------------------------------------------------------------------
if __name__ == "__main__":
    key = jax.random.PRNGKey(0)
    kx, kp1, kp2, kp3, kx2 = jax.random.split(key, 5)

    # Shapes: T*H = 128 -> one dense 128-lane matmul per layer.
    num_trees = 4
    batch, input_dim, hidden_dim, output_dim = 8, 16, 32, 8

    x = jax.random.normal(kx, (batch, input_dim), jnp.float32)

    # 1) num_layers = 3 (one hidden-hidden layer, static-unroll path).
    params = init_params(kp1, num_trees, 3, input_dim, hidden_dim, output_dim)
    out = jax.block_until_ready(random_forest_mlp(x, params))
    ref = reference_forward(x, params)
    assert out.shape == (batch, output_dim)
    assert jnp.allclose(out, ref, atol=3e-2, rtol=3e-2), "mismatch (3-layer)"

    # 2) num_layers = 2 (no hidden-hidden layers).
    params2 = init_params(kp2, num_trees, 2, input_dim, hidden_dim, output_dim)
    out2 = jax.block_until_ready(random_forest_mlp(x, params2))
    ref2 = reference_forward(x, params2)
    assert jnp.allclose(out2, ref2, atol=3e-2, rtol=3e-2), "mismatch (2-layer)"

    # 3) num_layers = 5 (deep path: fori_loop hidden chain) with a batch that
    #    exercises padding and the >=2-grid-step split (B=24 -> TB=16, nb=2).
    x3 = jax.random.normal(kx2, (24, input_dim), jnp.float32)
    params3 = init_params(kp3, num_trees, 5, input_dim, hidden_dim, output_dim)
    out3 = jax.block_until_ready(random_forest_mlp(x3, params3))
    ref3 = reference_forward(x3, params3)
    assert out3.shape == (24, output_dim)
    assert jnp.allclose(out3, ref3, atol=5e-2, rtol=5e-2), "mismatch (5-layer)"

    print("KERNEL_OK")
</pallas_src>

<mosaic_0001>
module attributes {stable_mosaic.version = 11 : i64} {
  func.func @kernel(%arg0: i32, %arg1: memref<8x16xf32, #tpu.memory_space<vmem>>, %arg2: memref<16x128xbf16, #tpu.memory_space<vmem>>, %arg3: memref<1x128xf32, #tpu.memory_space<vmem>>, %arg4: memref<1x128x128xbf16, #tpu.memory_space<vmem>>, %arg5: memref<1x1x128xf32, #tpu.memory_space<vmem>>, %arg6: memref<128x128xbf16, #tpu.memory_space<vmem>>, %arg7: memref<1x128xf32, #tpu.memory_space<vmem>>, %arg8: memref<8x128xf32, #tpu.memory_space<vmem>>) attributes {dimension_semantics = [#tpu.dimension_semantics<parallel>], iteration_bounds = array<i64: 1>, scalar_prefetch = 0 : i64, scratch_operands = 0 : i64, tpu.core_type = #tpu.core_type<tc>, window_params = [{transform_indices = @transform_0, window_bounds = array<i64: 8, 16>}, {pipeline_mode = #tpu.pipeline_mode<synchronous>, transform_indices = @transform_1, window_bounds = array<i64: 16, 128>}, {pipeline_mode = #tpu.pipeline_mode<synchronous>, transform_indices = @transform_2, window_bounds = array<i64: 1, 128>}, {pipeline_mode = #tpu.pipeline_mode<synchronous>, transform_indices = @transform_3, window_bounds = array<i64: 1, 128, 128>}, {pipeline_mode = #tpu.pipeline_mode<synchronous>, transform_indices = @transform_4, window_bounds = array<i64: 1, 1, 128>}, {pipeline_mode = #tpu.pipeline_mode<synchronous>, transform_indices = @transform_5, window_bounds = array<i64: 128, 128>}, {pipeline_mode = #tpu.pipeline_mode<synchronous>, transform_indices = @transform_6, window_bounds = array<i64: 1, 128>}, {transform_indices = @transform_7, window_bounds = array<i64: 8, 128>}]} {
    %c0 = arith.constant 0 : index
    %c0_0 = arith.constant 0 : index
    %0 = vector.load %arg1[%c0, %c0_0] : memref<8x16xf32, #tpu.memory_space<vmem>>, vector<8x16xf32>
    %1 = arith.truncf %0 : vector<8x16xf32> to vector<8x16xbf16>
    %c0_1 = arith.constant 0 : index
    %c0_2 = arith.constant 0 : index
    %2 = vector.load %arg2[%c0_1, %c0_2] : memref<16x128xbf16, #tpu.memory_space<vmem>>, vector<16x128xbf16>
    %cst = arith.constant dense<0.000000e+00> : vector<8x128xf32>
    %3 = tpu.matmul %1, %2, %cst {dimension_numbers = #tpu.dot_dimension_numbers<[1], [0], [0], [1], [0, 0, 1, 1], [], []>} : vector<8x16xbf16>, vector<16x128xbf16>, vector<8x128xf32> -> vector<8x128xf32>
    %c0_3 = arith.constant 0 : index
    %c0_4 = arith.constant 0 : index
    %4 = vector.load %arg3[%c0_3, %c0_4] : memref<1x128xf32, #tpu.memory_space<vmem>>, vector<1x128xf32>
    %5 = vector.broadcast %4 : vector<1x128xf32> to vector<8x128xf32>
    %6 = arith.addf %3, %5 : vector<8x128xf32>
    %cst_5 = arith.constant 0.000000e+00 : f32
    %7 = vector.broadcast %cst_5 : f32 to vector<8x128xf32>
    %8 = arith.maximumf %6, %7 : vector<8x128xf32>
    %9 = arith.truncf %8 : vector<8x128xf32> to vector<8x128xbf16>
    %c0_6 = arith.constant 0 : index
    %c0_7 = arith.constant 0 : index
    %c0_8 = arith.constant 0 : index
    %10 = vector.load %arg4[%c0_6, %c0_7, %c0_8] : memref<1x128x128xbf16, #tpu.memory_space<vmem>>, vector<1x128x128xbf16>
    %11 = vector.shape_cast %10 : vector<1x128x128xbf16> to vector<128x128xbf16>
    %cst_9 = arith.constant dense<0.000000e+00> : vector<8x128xf32>
    %12 = tpu.matmul %9, %11, %cst_9 {dimension_numbers = #tpu.dot_dimension_numbers<[1], [0], [0], [1], [0, 0, 1, 1], [], []>} : vector<8x128xbf16>, vector<128x128xbf16>, vector<8x128xf32> -> vector<8x128xf32>
    %c0_10 = arith.constant 0 : index
    %c0_11 = arith.constant 0 : index
    %c0_12 = arith.constant 0 : index
    %13 = vector.load %arg5[%c0_10, %c0_11, %c0_12] : memref<1x1x128xf32, #tpu.memory_space<vmem>>, vector<1x1x128xf32>
    %14 = vector.shape_cast %13 : vector<1x1x128xf32> to vector<1x128xf32>
    %15 = vector.broadcast %14 : vector<1x128xf32> to vector<8x128xf32>
    %16 = arith.addf %12, %15 : vector<8x128xf32>
    %cst_13 = arith.constant 0.000000e+00 : f32
    %17 = vector.broadcast %cst_13 : f32 to vector<8x128xf32>
    %18 = arith.maximumf %16, %17 : vector<8x128xf32>
    %19 = arith.truncf %18 : vector<8x128xf32> to vector<8x128xbf16>
    %c0_14 = arith.constant 0 : index
    %c0_15 = arith.constant 0 : index
    %20 = vector.load %arg6[%c0_14, %c0_15] : memref<128x128xbf16, #tpu.memory_space<vmem>>, vector<128x128xbf16>
    %cst_16 = arith.constant dense<0.000000e+00> : vector<8x128xf32>
    %21 = tpu.matmul %19, %20, %cst_16 {dimension_numbers = #tpu.dot_dimension_numbers<[1], [0], [0], [1], [0, 0, 1, 1], [], []>} : vector<8x128xbf16>, vector<128x128xbf16>, vector<8x128xf32> -> vector<8x128xf32>
    %c0_17 = arith.constant 0 : index
    %c0_18 = arith.constant 0 : index
    %22 = vector.load %arg7[%c0_17, %c0_18] : memref<1x128xf32, #tpu.memory_space<vmem>>, vector<1x128xf32>
    %23 = vector.broadcast %22 : vector<1x128xf32> to vector<8x128xf32>
    %24 = arith.addf %21, %23 : vector<8x128xf32>
    %c0_19 = arith.constant 0 : index
    %c0_20 = arith.constant 0 : index
    %25 = vector.load %arg8[%c0_19, %c0_20] : memref<8x128xf32, #tpu.memory_space<vmem>>, vector<8x128xf32>
    tpu.vector_store %arg8[%c0_19, %c0_20], %24 {strides = array<i32>} : memref<8x128xf32, #tpu.memory_space<vmem>>, vector<8x128xf32>,
    return
  }
  func.func @transform_0(%arg0: i32) -> (i32, i32) {
    %c0_i32 = arith.constant 0 : i32
    %c0_i32_0 = arith.constant 0 : i32
    return %arg0, %c0_i32 : i32, i32
  }
  func.func @transform_1(%arg0: i32) -> (i32, i32) {
    %c0_i32 = arith.constant 0 : i32
    %c0_i32_0 = arith.constant 0 : i32
    %c0_i32_1 = arith.constant 0 : i32
    return %c0_i32, %c0_i32_0 : i32, i32
  }
  func.func @transform_2(%arg0: i32) -> (i32, i32) {
    %c0_i32 = arith.constant 0 : i32
    %c0_i32_0 = arith.constant 0 : i32
    %c0_i32_1 = arith.constant 0 : i32
    return %c0_i32, %c0_i32_0 : i32, i32
  }
  func.func @transform_3(%arg0: i32) -> (i32, i32, i32) {
    %c0_i32 = arith.constant 0 : i32
    %c0_i32_0 = arith.constant 0 : i32
    %c0_i32_1 = arith.constant 0 : i32
    %c0_i32_2 = arith.constant 0 : i32
    return %c0_i32, %c0_i32_0, %c0_i32_1 : i32, i32, i32
  }
  func.func @transform_4(%arg0: i32) -> (i32, i32, i32) {
    %c0_i32 = arith.constant 0 : i32
    %c0_i32_0 = arith.constant 0 : i32
    %c0_i32_1 = arith.constant 0 : i32
    %c0_i32_2 = arith.constant 0 : i32
    return %c0_i32, %c0_i32_0, %c0_i32_1 : i32, i32, i32
  }
  func.func @transform_5(%arg0: i32) -> (i32, i32) {
    %c0_i32 = arith.constant 0 : i32
    %c0_i32_0 = arith.constant 0 : i32
    %c0_i32_1 = arith.constant 0 : i32
    return %c0_i32, %c0_i32_0 : i32, i32
  }
  func.func @transform_6(%arg0: i32) -> (i32, i32) {
    %c0_i32 = arith.constant 0 : i32
    %c0_i32_0 = arith.constant 0 : i32
    %c0_i32_1 = arith.constant 0 : i32
    return %c0_i32, %c0_i32_0 : i32, i32
  }
  func.func @transform_7(%arg0: i32) -> (i32, i32) {
    %c0_i32 = arith.constant 0 : i32
    %c0_i32_0 = arith.constant 0 : i32
    return %arg0, %c0_i32 : i32, i32
  }
}

</mosaic_0001>

<llo_original>
// kernel: tpu_custom_call.1
$region0: #{tpu_custom_call.1}
  #allocation0 [shape = 'u32[]', space=smem, size = 0x4, offset = 0x4, fixed_abs, tag = 'smem constant byte address 0x4 - core index']
  #allocation1 [shape = 'u32[72,128]{1,0:T(1,128)}', space=vmem, size = 0x9000, scoped, tag = 'internal scratch']
  %s0 = inlined_call_operand.hbm [shape: f32[8,16], index: 0, kind: input, shape index: {}]
  %s1 = inlined_call_operand.hbm [shape: bf16[16,128], index: 1, kind: input, shape index: {}]
  %s2 = inlined_call_operand.vmem [shape: f32[1,128], index: 2, kind: input, shape index: {}]
  %s3 = inlined_call_operand.hbm [shape: bf16[1,128,128], index: 3, kind: input, shape index: {}]
  %s4 = inlined_call_operand.vmem [shape: f32[1,1,128], index: 4, kind: input, shape index: {}]
  %s5 = inlined_call_operand.hbm [shape: bf16[128,128], index: 5, kind: input, shape index: {}]
  %s6 = inlined_call_operand.vmem [shape: f32[1,128], index: 6, kind: input, shape index: {}]
  %s7 = inlined_call_operand.hbm [shape: f32[8,128], index: 7, kind: output, shape index: {}]
  %s8 = sld [smem:[#allocation0]]
  $region54: #{tpu_custom_call.1} parent=0
    _
  %s10 = ssub.s32 1, %s8
  %s11 = scalar_select 0, %s10, %s8
  $region1: #{tpu_custom_call.1} parent=0
    #allocation2 [shape = 'u8[4096]{0}', space=vmem, size = 0x1000, scoped, tag = 'input window, operand 0, single buffered']
    #allocation3 [shape = 's32[1]{0}', space=sflag, size = 0x4, scoped, tag = 'scoped memory for tpu_custom_call.1']
    #allocation4 [shape = 's32[1]{0}', space=sflag, size = 0x4, scoped, tag = 'scoped memory for tpu_custom_call.1']
    #allocation5 [shape = 'u8[4096]{0}', space=vmem, size = 0x1000, scoped, tag = 'input window, operand 1, single buffered']
    #allocation6 [shape = 's32[1]{0}', space=sflag, size = 0x4, scoped, tag = 'scoped memory for tpu_custom_call.1']
    #allocation7 [shape = 'u8[32768]{0}', space=vmem, size = 0x8000, scoped, tag = 'input window, operand 3, single buffered']
    #allocation8 [shape = 'u8[32768]{0}', space=vmem, size = 0x8000, scoped, tag = 'input window, operand 5, single buffered']
    #allocation9 [shape = 's32[1]{0}', space=sflag, size = 0x4, scoped, tag = 'scoped memory for tpu_custom_call.1']
    #allocation10 [shape = 'u8[4096]{0}', space=vmem, size = 0x1000, scoped, tag = 'output window, operand 0, single buffered']
    %12 = vsyncpa [#allocation3], 0
    %13 = vsyncpa [#allocation6], 0
    %14 = vsyncpa [#allocation9], 0
    %15 = vsyncpa [#allocation4], 0
    // Predicated region
    $region2: #{tpu_custom_call.1} parent=1 // pred_check
      _
    $region3: #{tpu_custom_call.1} parent=1 // pred_check_branch
      %17 = sbr.rel (0) target = $region5
    $region4: #{tpu_custom_call.1} parent=1 // pred_region
      %19 = vsyncadd [#allocation3], 0
      %s21 = sshll.u32 %s0, 4
      %s22 = int_to_ptr.hbm [resolvable:$true] %s21
      %s23 = sshll.u32 [#allocation2], 4
      %s24 = int_to_ptr.vmem [resolvable:$true] %s23
      %26 = dma.hbm_to_vmem [thread:$0]  %s22, 128, %s24, [#allocation3]
    $region5: #{tpu_custom_call.1} parent=1 // pred_fallthru
      _
    // Predicated region
    $region6: #{tpu_custom_call.1} parent=1 // pred_check
      _
    $region7: #{tpu_custom_call.1} parent=1 // pred_check_branch
      %28 = sbr.rel (0) target = $region9
    $region8: #{tpu_custom_call.1} parent=1 // pred_region
      %30 = vsyncadd [#allocation6], 0
      %s31 = sshll.u32 %s1, 4
      %s32 = int_to_ptr.hbm [resolvable:$true] %s31
      %s33 = sshll.u32 [#allocation5], 4
      %s34 = int_to_ptr.vmem [resolvable:$true] %s33
      %39 = dma.hbm_to_vmem [thread:$0]  %s32, 128, %s34, [#allocation6], 64, 64, 4
    $region9: #{tpu_custom_call.1} parent=1 // pred_fallthru
      _
    // Predicated region
    $region10: #{tpu_custom_call.1} parent=1 // pred_check
      _
    $region11: #{tpu_custom_call.1} parent=1 // pred_check_branch
      %41 = sbr.rel (0) target = $region13
    $region12: #{tpu_custom_call.1} parent=1 // pred_region
      _
    $region13: #{tpu_custom_call.1} parent=1 // pred_fallthru
      _
    // Predicated region
    $region14: #{tpu_custom_call.1} parent=1 // pred_check
      _
    $region15: #{tpu_custom_call.1} parent=1 // pred_check_branch
      %43 = sbr.rel (0) target = $region17
    $region16: #{tpu_custom_call.1} parent=1 // pred_region
      %45 = vsyncadd [#allocation6], 0
      %s46 = sshll.u32 %s3, 4
      %s47 = int_to_ptr.hbm [resolvable:$true] %s46
      %s48 = sshll.u32 [#allocation7], 4
      %s49 = int_to_ptr.vmem [resolvable:$true] %s48
      %54 = dma.hbm_to_vmem [thread:$0]  %s47, 1024, %s49, [#allocation6], 64, 64, 4
    $region17: #{tpu_custom_call.1} parent=1 // pred_fallthru
      _
    // Predicated region
    $region18: #{tpu_custom_call.1} parent=1 // pred_check
      _
    $region19: #{tpu_custom_call.1} parent=1 // pred_check_branch
      %56 = sbr.rel (0) target = $region21
    $region20: #{tpu_custom_call.1} parent=1 // pred_region
      _
    $region21: #{tpu_custom_call.1} parent=1 // pred_fallthru
      _
    // Predicated region
    $region22: #{tpu_custom_call.1} parent=1 // pred_check
      _
    $region23: #{tpu_custom_call.1} parent=1 // pred_check_branch
      %58 = sbr.rel (0) target = $region25
    $region24: #{tpu_custom_call.1} parent=1 // pred_region
      %60 = vsyncadd [#allocation9], 0
      %s61 = sshll.u32 %s5, 4
      %s62 = int_to_ptr.hbm [resolvable:$true] %s61
      %s63 = sshll.u32 [#allocation8], 4
      %s64 = int_to_ptr.vmem [resolvable:$true] %s63
      %69 = dma.hbm_to_vmem [thread:$0]  %s62, 1024, %s64, [#allocation9], 64, 64, 4
    $region25: #{tpu_custom_call.1} parent=1 // pred_fallthru
      _
    // Predicated region
    $region26: #{tpu_custom_call.1} parent=1 // pred_check
      _
    $region27: #{tpu_custom_call.1} parent=1 // pred_check_branch
      %71 = sbr.rel (0) target = $region29
    $region28: #{tpu_custom_call.1} parent=1 // pred_region
      _
    $region29: #{tpu_custom_call.1} parent=1 // pred_fallthru
      _
    // Predicated region
    $region30: #{tpu_custom_call.1} parent=1 // pred_check
      _
    $region31: #{tpu_custom_call.1} parent=1 // pred_check_branch
      %73 = sbr.rel (0) target = $region33
    $region32: #{tpu_custom_call.1} parent=1 // pred_region
      %75 = dma.done [#allocation3], 128
    $region33: #{tpu_custom_call.1} parent=1 // pred_fallthru
      _
    // Predicated region
    $region34: #{tpu_custom_call.1} parent=1 // pred_check
      _
    $region35: #{tpu_custom_call.1} parent=1 // pred_check_branch
      %77 = sbr.rel (0) target = $region37
    $region36: #{tpu_custom_call.1} parent=1 // pred_region
      %79 = dma.done [#allocation6], 128
    $region37: #{tpu_custom_call.1} parent=1 // pred_fallthru
      _
    // Predicated region
    $region38: #{tpu_custom_call.1} parent=1 // pred_check
      _
    $region39: #{tpu_custom_call.1} parent=1 // pred_check_branch
      %81 = sbr.rel (0) target = $region41
    $region40: #{tpu_custom_call.1} parent=1 // pred_region
      %83 = dma.done [#allocation6], 1024
    $region41: #{tpu_custom_call.1} parent=1 // pred_fallthru
      _
    // Predicated region
    $region42: #{tpu_custom_call.1} parent=1 // pred_check
      _
    $region43: #{tpu_custom_call.1} parent=1 // pred_check_branch
      %85 = sbr.rel (0) target = $region45
    $region44: #{tpu_custom_call.1} parent=1 // pred_region
      %87 = dma.done [#allocation9], 1024
    $region45: #{tpu_custom_call.1} parent=1 // pred_fallthru
      _
    %v89 = vld [vmem:[#allocation2] sm:$0xff]
    %v90 = vpack.c.bf16 %v89, %v89
    %v91 = vld [vmem:[#allocation5] sm:$0xf]
    %v92 = vld [vmem:[#allocation5 + $0x4] sm:$0xf]
    %v93 = vld [vmem:[%s2] sm:$0x1]
    %v95 = vperm.slane %v93, 0
    %v99 = vunpack.c.l.b16 %v91
    %v100 = vunpack.c.l.b16 %v92
    %v101 = vpack.c.b16 %v100, %v99
    %vm103 = vcmask 130048
    %v105 = vsel %vm103, %v90, 0
    %107 = vmatpush.bf16.msra.mxu0 0
    %108 = vmatpush.bf16.msra.mxu0 0
    %109 = vmatpush.bf16.msra.mxu0 0
    %110 = vmatpush.bf16.msra.mxu0 0
    %111 = vmatpush.bf16.msra.mxu0 0
    %112 = vmatpush.bf16.msra.mxu0 0
    %113 = vmatpush.bf16.msra.mxu0 0
    %114 = vmatpush.bf16.msra.mxu0 %v101
    %115 = vmatmul.bf16.gmra.mxu0 %v105
    %v116 = vpop.f32.mrf.mxu0
    %v117 = vadd.f32 %v95, %v116
    %v118 = vpop.f32.mrf.mxu0
    %119 = vdwg.mxu0
    %v120 = vmax.f32 %v117, 0.0
    %v121 = vpack.c.bf16 %v120, %v120
    %v122 = vld [vmem:[#allocation7] sm:$0xf]
    %v123 = vld [vmem:[#allocation7 + $0x4] sm:$0xf]
    %v124 = vld [vmem:[#allocation7 + $0x8] sm:$0xf]
    %v125 = vld [vmem:[#allocation7 + $0xc] sm:$0xf]
    %v126 = vld [vmem:[#allocation7 + $0x10] sm:$0xf]
    %v127 = vld [vmem:[#allocation7 + $0x14] sm:$0xf]
    %v128 = vld [vmem:[#allocation7 + $0x18] sm:$0xf]
    %v129 = vld [vmem:[#allocation7 + $0x1c] sm:$0xf]
    %v130 = vld [vmem:[#allocation7 + $0x20] sm:$0xf]
    %v131 = vld [vmem:[#allocation7 + $0x24] sm:$0xf]
    %v132 = vld [vmem:[#allocation7 + $0x28] sm:$0xf]
    %v133 = vld [vmem:[#allocation7 + $0x2c] sm:$0xf]
    %v134 = vld [vmem:[#allocation7 + $0x30] sm:$0xf]
    %v135 = vld [vmem:[#allocation7 + $0x34] sm:$0xf]
    %v136 = vld [vmem:[#allocation7 + $0x38] sm:$0xf]
    %v137 = vld [vmem:[#allocation7 + $0x3c] sm:$0xf]
    %v138 = vld [vmem:[%s4] sm:$0x1]
    %v140 = vperm.slane %v138, 0
    %v158 = vunpack.c.l.b16 %v122
    %v159 = vunpack.c.l.b16 %v123
    %v160 = vunpack.c.l.b16 %v124
    %v161 = vunpack.c.l.b16 %v125
    %v162 = vunpack.c.l.b16 %v126
    %v163 = vunpack.c.l.b16 %v127
    %v164 = vunpack.c.l.b16 %v128
    %v165 = vunpack.c.l.b16 %v129
    %v166 = vunpack.c.l.b16 %v130
    %v167 = vunpack.c.l.b16 %v131
    %v168 = vunpack.c.l.b16 %v132
    %v169 = vunpack.c.l.b16 %v133
    %v170 = vunpack.c.l.b16 %v134
    %v171 = vunpack.c.l.b16 %v135
    %v172 = vunpack.c.l.b16 %v136
    %v173 = vunpack.c.l.b16 %v137
    %v174 = vpack.c.b16 %v159, %v158
    %v175 = vpack.c.b16 %v161, %v160
    %v176 = vpack.c.b16 %v163, %v162
    %v177 = vpack.c.b16 %v165, %v164
    %v178 = vpack.c.b16 %v167, %v166
    %v179 = vpack.c.b16 %v169, %v168
    %v180 = vpack.c.b16 %v171, %v170
    %v181 = vpack.c.b16 %v173, %v172
    %190 = vmatpush.bf16.msra.mxu0 %v181
    %191 = vmatpush.bf16.msra.mxu0 %v180
    %192 = vmatpush.bf16.msra.mxu0 %v179
    %193 = vmatpush.bf16.msra.mxu0 %v178
    %194 = vmatpush.bf16.msra.mxu0 %v177
    %195 = vmatpush.bf16.msra.mxu0 %v176
    %196 = vmatpush.bf16.msra.mxu0 %v175
    %197 = vmatpush.bf16.msra.mxu0 %v174
    %198 = vmatmul.bf16.gmra.mxu0 %v121
    %v199 = vpop.f32.mrf.mxu0
    %v200 = vadd.f32 %v140, %v199
    %v201 = vpop.f32.mrf.mxu0
    %202 = vdwg.mxu0
    %v203 = vmax.f32 %v200, 0.0
    %v204 = vpack.c.bf16 %v203, %v203
    %v205 = vld [vmem:[#allocation8] sm:$0xf]
    %v206 = vld [vmem:[#allocation8 + $0x4] sm:$0xf]
    %v207 = vld [vmem:[#allocation8 + $0x8] sm:$0xf]
    %v208 = vld [vmem:[#allocation8 + $0xc] sm:$0xf]
    %v209 = vld [vmem:[#allocation8 + $0x10] sm:$0xf]
    %v210 = vld [vmem:[#allocation8 + $0x14] sm:$0xf]
    %v211 = vld [vmem:[#allocation8 + $0x18] sm:$0xf]
    %v212 = vld [vmem:[#allocation8 + $0x1c] sm:$0xf]
    %v213 = vld [vmem:[#allocation8 + $0x20] sm:$0xf]
    %v214 = vld [vmem:[#allocation8 + $0x24] sm:$0xf]
    %v215 = vld [vmem:[#allocation8 + $0x28] sm:$0xf]
    %v216 = vld [vmem:[#allocation8 + $0x2c] sm:$0xf]
    %v217 = vld [vmem:[#allocation8 + $0x30] sm:$0xf]
    %v218 = vld [vmem:[#allocation8 + $0x34] sm:$0xf]
    %v219 = vld [vmem:[#allocation8 + $0x38] sm:$0xf]
    %v220 = vld [vmem:[#allocation8 + $0x3c] sm:$0xf]
    %v221 = vld [vmem:[%s6] sm:$0x1]
    %v223 = vperm.slane %v221, 0
    %v241 = vunpack.c.l.b16 %v205
    %v242 = vunpack.c.l.b16 %v206
    %v243 = vunpack.c.l.b16 %v207
    %v244 = vunpack.c.l.b16 %v208
    %v245 = vunpack.c.l.b16 %v209
    %v246 = vunpack.c.l.b16 %v210
    %v247 = vunpack.c.l.b16 %v211
    %v248 = vunpack.c.l.b16 %v212
    %v249 = vunpack.c.l.b16 %v213
    %v250 = vunpack.c.l.b16 %v214
    %v251 = vunpack.c.l.b16 %v215
    %v252 = vunpack.c.l.b16 %v216
    %v253 = vunpack.c.l.b16 %v217
    %v254 = vunpack.c.l.b16 %v218
    %v255 = vunpack.c.l.b16 %v219
    %v256 = vunpack.c.l.b16 %v220
    %v257 = vpack.c.b16 %v242, %v241
    %v258 = vpack.c.b16 %v244, %v243
    %v259 = vpack.c.b16 %v246, %v245
    %v260 = vpack.c.b16 %v248, %v247
    %v261 = vpack.c.b16 %v250, %v249
    %v262 = vpack.c.b16 %v252, %v251
    %v263 = vpack.c.b16 %v254, %v253
    %v264 = vpack.c.b16 %v256, %v255
    %273 = vmatpush.bf16.msra.mxu0 %v264
    %274 = vmatpush.bf16.msra.mxu0 %v263
    %275 = vmatpush.bf16.msra.mxu0 %v262
    %276 = vmatpush.bf16.msra.mxu0 %v261
    %277 = vmatpush.bf16.msra.mxu0 %v260
    %278 = vmatpush.bf16.msra.mxu0 %v259
    %279 = vmatpush.bf16.msra.mxu0 %v258
    %280 = vmatpush.bf16.msra.mxu0 %v257
    %281 = vmatmul.bf16.gmra.mxu0 %v204
    %v282 = vpop.f32.mrf.mxu0
    %v283 = vadd.f32 %v223, %v282
    %v284 = vpop.f32.mrf.mxu0
    %285 = vdwg.mxu0
    %286 = vst [vmem:[#allocation10] sm:$0xff] %v283
    // Predicated region
    $region46: #{tpu_custom_call.1} parent=1 // pred_check
      _
    $region47: #{tpu_custom_call.1} parent=1 // pred_check_branch
      %288 = sbr.rel (0) target = $region49
    $region48: #{tpu_custom_call.1} parent=1 // pred_region
      %290 = vsyncadd [#allocation4], 0
      %s292 = sshll.u32 [#allocation10], 4
      %s293 = int_to_ptr.vmem [resolvable:$true] %s292
      %s294 = sshll.u32 %s7, 4
      %s295 = int_to_ptr.hbm [resolvable:$true] %s294
      %297 = dma.vmem_to_hbm [thread:$0]  %s293, 128, %s295, [#allocation4]
    $region49: #{tpu_custom_call.1} parent=1 // pred_fallthru
      _
    // Predicated region
    $region50: #{tpu_custom_call.1} parent=1 // pred_check
      _
    $region51: #{tpu_custom_call.1} parent=1 // pred_check_branch
      %299 = sbr.rel (0) target = $region53
    $region52: #{tpu_custom_call.1} parent=1 // pred_region
      %301 = dma.done [#allocation4], 128
    $region53: #{tpu_custom_call.1} parent=1 // pred_fallthru
      _
    %302 = vsyncpa [#allocation3], 1
    %303 = vsyncpa [#allocation6], 1
    %304 = vsyncpa [#allocation9], 1
    %305 = vsyncpa [#allocation4], 1

</llo_original>
